<compile_context>
chip_gen: v7x
topology: tpu7x:2x2x1
jax: 0.10.0
libtpu: 0.0.40
codegen_flags: <defaults>
</compile_context>

<pallas_src>
import functools

import numpy as np
import jax
import jax.numpy as jnp
from jax import lax
from jax.experimental import pallas as pl
from jax.experimental.pallas import tpu as pltpu

_NORM_EPS_SQ = 1e-24  # (F.normalize eps = 1e-12) ** 2


def _contrastive_kernel(reps_ref, row_ref, loss_ref, *, bs, valid_m, inv_temp):
    """One row tile of the NT-Xent loss.

    reps_ref: (Mp, D) full, VMEM-resident.  row_ref: (TM, D) tile of the same array.
    loss_ref: (TM, 1) per-row loss (0 for padded rows).
    """
    i = pl.program_id(0)
    tm = row_ref.shape[0]
    mp = reps_ref.shape[0]

    # L2-normalize (zero-padded rows stay exactly zero).
    x_all = reps_ref[...]
    z_all = x_all * lax.rsqrt(
        jnp.maximum(jnp.sum(x_all * x_all, axis=1, keepdims=True), _NORM_EPS_SQ))
    x_row = row_ref[...]
    z_row = x_row * lax.rsqrt(
        jnp.maximum(jnp.sum(x_row * x_row, axis=1, keepdims=True), _NORM_EPS_SQ))

    # (TM, Mp) cosine-similarity tile: rows are unit-norm, so it is z_row @ z_all^T.
    sim = lax.dot_general(z_row, z_all, (((1,), (1,)), ((), ())),
                          preferred_element_type=jnp.float32)

    row_ids = i * tm + lax.broadcasted_iota(jnp.int32, (tm, mp), 0)
    col_ids = lax.broadcasted_iota(jnp.int32, (tm, mp), 1)
    col_valid = col_ids < valid_m
    not_diag = col_ids != row_ids

    # denominator: sum over all valid non-diagonal columns of exp(sim / T)
    e = jnp.exp(sim * inv_temp)
    denom = jnp.sum(jnp.where(col_valid & not_diag, e, 0.0),
                    axis=1, keepdims=True)                              # (TM, 1)

    # positive-pair column: (r + bs) mod M, written branch-free to avoid vector rem.
    pos_col = jnp.where(row_ids < bs, row_ids + bs, row_ids - bs)
    pos = jnp.sum(jnp.where(col_ids == pos_col, sim, 0.0),
                  axis=1, keepdims=True)                                # (TM, 1)

    row_valid = (i * tm + lax.broadcasted_iota(jnp.int32, (tm, 1), 0)) < valid_m
    loss_ref[...] = jnp.where(row_valid, jnp.log(denom) - pos * inv_temp, 0.0)


def contrastive_loss(instance_emb, bag_emb, temperature=0.5, row_tile=None):
    """Pallas forward of ContrastiveLoss. instance_emb: (B, N, D), bag_emb: (B, D)."""
    B, N, D = instance_emb.shape
    bs = B * N
    m = 2 * bs

    # Layout glue only: reshape + repeat_interleave + concat (+ zero-pad rows to tile).
    emb_i = instance_emb.reshape(bs, D).astype(jnp.float32)
    emb_j = jnp.repeat(bag_emb.astype(jnp.float32), N, axis=0)
    reps = jnp.concatenate([emb_i, emb_j], axis=0)                      # (M, D)

    if row_tile is None:
        row_tile = min(128, ((m + 7) // 8) * 8)
    tm = max(8, (row_tile // 8) * 8)                                    # sublane-aligned
    mp = ((m + tm - 1) // tm) * tm
    if mp > m:
        reps = jnp.pad(reps, ((0, mp - m), (0, 0)))

    kernel = functools.partial(_contrastive_kernel, bs=bs, valid_m=m,
                               inv_temp=1.0 / float(temperature))

    row_losses = pl.pallas_call(
        kernel,
        out_shape=jax.ShapeDtypeStruct((mp, 1), jnp.float32),
        grid_spec=pltpu.PrefetchScalarGridSpec(
            num_scalar_prefetch=0,
            grid=(mp // tm,),
            in_specs=[
                pl.BlockSpec((mp, D), lambda i: (0, 0)),   # reps: resident across grid
                pl.BlockSpec((tm, D), lambda i: (i, 0)),   # pipelined row tile
            ],
            out_specs=pl.BlockSpec((tm, 1), lambda i: (i, 0)),
        ),
        compiler_params=pltpu.CompilerParams(dimension_semantics=("parallel",)),
    )(reps, reps)

    # TODO(synk): the `device` argument of the PyTorch forward is a placement no-op in JAX.
    return jnp.sum(row_losses) / m


def reference_loss(instance_emb, bag_emb, temperature):
    """Pure-JAX reference mirroring the PyTorch module exactly."""
    B, N, D = instance_emb.shape
    bs = B * N
    emb_i = instance_emb.reshape(bs, D)
    emb_j = jnp.repeat(bag_emb, N, axis=0)

    def l2norm(x):
        n = jnp.sqrt(jnp.sum(x * x, axis=1, keepdims=True))
        return x / jnp.maximum(n, 1e-12)

    reps = jnp.concatenate([l2norm(emb_i), l2norm(emb_j)], axis=0)      # (2*bs, D)
    norms = jnp.sqrt(jnp.sum(reps * reps, axis=1))
    dots = jnp.dot(reps, reps.T, precision=jax.lax.Precision.HIGHEST)
    sim = dots / jnp.maximum(norms[:, None] * norms[None, :], 1e-8)     # cosine_similarity

    sim_ij = jnp.diagonal(sim, offset=bs)
    sim_ji = jnp.diagonal(sim, offset=-bs)
    positives = jnp.concatenate([sim_ij, sim_ji], axis=0)
    nominator = jnp.exp(positives / temperature)
    mask = 1.0 - jnp.eye(2 * bs, dtype=jnp.float32)
    denominator = jnp.sum(mask * jnp.exp(sim / temperature), axis=1)
    loss_partial = -jnp.log(nominator / denominator)
    return jnp.sum(loss_partial) / (2 * bs)


if __name__ == "__main__":
    B, N, D = 2, 8, 32          # bags, instances per bag, embedding dim
    temperature = 0.5

    key = jax.random.PRNGKey(0)
    k_inst, k_bag = jax.random.split(key)
    instance_emb = jax.random.normal(k_inst, (B, N, D), dtype=jnp.float32)
    bag_emb = jax.random.normal(k_bag, (B, D), dtype=jnp.float32)

    # row_tile=8 exercises a 4-point pipelined/parallel grid at this small size.
    loss = contrastive_loss(instance_emb, bag_emb, temperature=temperature, row_tile=8)
    loss = jax.block_until_ready(loss)

    ref = reference_loss(instance_emb, bag_emb, temperature)
    np.testing.assert_allclose(np.asarray(loss), np.asarray(ref), rtol=1e-4, atol=1e-4)

    print("KERNEL_OK")
</pallas_src>

<mosaic_0001>
module attributes {stable_mosaic.version = 11 : i64} {
  func.func @_contrastive_kernel(%arg0: i32, %arg1: memref<32x32xf32, #tpu.memory_space<vmem>>, %arg2: memref<8x32xf32, #tpu.memory_space<vmem>>, %arg3: memref<8x1xf32, #tpu.memory_space<vmem>>) attributes {dimension_semantics = [#tpu.dimension_semantics<parallel>], iteration_bounds = array<i64: 4>, scalar_prefetch = 0 : i64, scratch_operands = 0 : i64, tpu.core_type = #tpu.core_type<tc>, window_params = [{pipeline_mode = #tpu.pipeline_mode<synchronous>, transform_indices = @transform_0, window_bounds = array<i64: 32, 32>}, {transform_indices = @transform_1, window_bounds = array<i64: 8, 32>}, {transform_indices = @transform_2, window_bounds = array<i64: 8, 1>}]} {
    %c0 = arith.constant 0 : index
    %c0_0 = arith.constant 0 : index
    %0 = vector.load %arg1[%c0, %c0_0] : memref<32x32xf32, #tpu.memory_space<vmem>>, vector<32x32xf32>
    %1 = arith.mulf %0, %0 : vector<32x32xf32>
    %cst = arith.constant dense<0.000000e+00> : vector<32xf32>
    %2 = vector.multi_reduction <add>, %1, %cst [1] : vector<32x32xf32> to vector<32xf32>
    %3 = vector.shape_cast %2 : vector<32xf32> to vector<32x1xf32>
    %cst_1 = arith.constant 1.000000e-24 : f32
    %4 = vector.broadcast %cst_1 : f32 to vector<32x1xf32>
    %5 = arith.maximumf %3, %4 : vector<32x1xf32>
    %6 = math.rsqrt %5 : vector<32x1xf32>
    %7 = vector.broadcast %6 : vector<32x1xf32> to vector<32x32xf32>
    %8 = arith.mulf %0, %7 : vector<32x32xf32>
    %c0_2 = arith.constant 0 : index
    %c0_3 = arith.constant 0 : index
    %9 = vector.load %arg2[%c0_2, %c0_3] : memref<8x32xf32, #tpu.memory_space<vmem>>, vector<8x32xf32>
    %10 = arith.mulf %9, %9 : vector<8x32xf32>
    %cst_4 = arith.constant dense<0.000000e+00> : vector<8xf32>
    %11 = vector.multi_reduction <add>, %10, %cst_4 [1] : vector<8x32xf32> to vector<8xf32>
    %12 = vector.shape_cast %11 : vector<8xf32> to vector<8x1xf32>
    %cst_5 = arith.constant 1.000000e-24 : f32
    %13 = vector.broadcast %cst_5 : f32 to vector<8x1xf32>
    %14 = arith.maximumf %12, %13 : vector<8x1xf32>
    %15 = math.rsqrt %14 : vector<8x1xf32>
    %16 = vector.broadcast %15 : vector<8x1xf32> to vector<8x32xf32>
    %17 = arith.mulf %9, %16 : vector<8x32xf32>
    %cst_6 = arith.constant dense<0.000000e+00> : vector<8x32xf32>
    %18 = tpu.matmul %17, %8, %cst_6 {dimension_numbers = #tpu.dot_dimension_numbers<[1], [1], [0], [0], [0, 0, 1, 0], [], []>} : vector<8x32xf32>, vector<32x32xf32>, vector<8x32xf32> -> vector<8x32xf32>
    %c8_i32 = arith.constant 8 : i32
    %19 = arith.muli %arg0, %c8_i32 : i32
    %20 = tpu.iota {dimensions = array<i32: 0>} : vector<8x32xi32>
    %21 = vector.broadcast %19 : i32 to vector<8x32xi32>
    %22 = arith.addi %21, %20 : vector<8x32xi32>
    %23 = tpu.iota {dimensions = array<i32: 1>} : vector<8x32xi32>
    %c32_i32 = arith.constant 32 : i32
    %24 = vector.broadcast %c32_i32 : i32 to vector<8x32xi32>
    %25 = arith.cmpi slt, %23, %24 : vector<8x32xi32>
    %26 = arith.cmpi ne, %23, %22 : vector<8x32xi32>
    %cst_7 = arith.constant 2.000000e+00 : f32
    %27 = vector.broadcast %cst_7 : f32 to vector<8x32xf32>
    %28 = arith.mulf %18, %27 : vector<8x32xf32>
    %29 = math.exp %28 : vector<8x32xf32>
    %30 = arith.andi %25, %26 : vector<8x32xi1>
    %cst_8 = arith.constant 0.000000e+00 : f32
    %31 = vector.broadcast %cst_8 : f32 to vector<8x32xf32>
    %32 = arith.select %30, %29, %31 : vector<8x32xi1>, vector<8x32xf32>
    %cst_9 = arith.constant dense<0.000000e+00> : vector<8xf32>
    %33 = vector.multi_reduction <add>, %32, %cst_9 [1] : vector<8x32xf32> to vector<8xf32>
    %34 = vector.shape_cast %33 : vector<8xf32> to vector<8x1xf32>
    %c16_i32 = arith.constant 16 : i32
    %35 = vector.broadcast %c16_i32 : i32 to vector<8x32xi32>
    %36 = arith.cmpi slt, %22, %35 : vector<8x32xi32>
    %c16_i32_10 = arith.constant 16 : i32
    %37 = vector.broadcast %c16_i32_10 : i32 to vector<8x32xi32>
    %38 = arith.addi %22, %37 : vector<8x32xi32>
    %c16_i32_11 = arith.constant 16 : i32
    %39 = vector.broadcast %c16_i32_11 : i32 to vector<8x32xi32>
    %40 = arith.subi %22, %39 : vector<8x32xi32>
    %41 = arith.select %36, %38, %40 : vector<8x32xi1>, vector<8x32xi32>
    %42 = arith.cmpi eq, %23, %41 : vector<8x32xi32>
    %cst_12 = arith.constant 0.000000e+00 : f32
    %43 = vector.broadcast %cst_12 : f32 to vector<8x32xf32>
    %44 = arith.select %42, %18, %43 : vector<8x32xi1>, vector<8x32xf32>
    %cst_13 = arith.constant dense<0.000000e+00> : vector<8xf32>
    %45 = vector.multi_reduction <add>, %44, %cst_13 [1] : vector<8x32xf32> to vector<8xf32>
    %46 = vector.shape_cast %45 : vector<8xf32> to vector<8x1xf32>
    %c8_i32_14 = arith.constant 8 : i32
    %47 = arith.muli %arg0, %c8_i32_14 : i32
    %48 = tpu.iota {dimensions = array<i32: 0>} : vector<8x1xi32>
    %49 = vector.broadcast %47 : i32 to vector<8x1xi32>
    %50 = arith.addi %49, %48 : vector<8x1xi32>
    %c32_i32_15 = arith.constant 32 : i32
    %51 = vector.broadcast %c32_i32_15 : i32 to vector<8x1xi32>
    %52 = arith.cmpi slt, %50, %51 : vector<8x1xi32>
    %53 = math.log %34 : vector<8x1xf32>
    %cst_16 = arith.constant 2.000000e+00 : f32
    %54 = vector.broadcast %cst_16 : f32 to vector<8x1xf32>
    %55 = arith.mulf %46, %54 : vector<8x1xf32>
    %56 = arith.subf %53, %55 : vector<8x1xf32>
    %cst_17 = arith.constant 0.000000e+00 : f32
    %57 = vector.broadcast %cst_17 : f32 to vector<8x1xf32>
    %58 = arith.select %52, %56, %57 : vector<8x1xi1>, vector<8x1xf32>
    %c0_18 = arith.constant 0 : index
    %c0_19 = arith.constant 0 : index
    %59 = vector.load %arg3[%c0_18, %c0_19] : memref<8x1xf32, #tpu.memory_space<vmem>>, vector<8x1xf32>
    tpu.vector_store %arg3[%c0_18, %c0_19], %58 {strides = array<i32>} : memref<8x1xf32, #tpu.memory_space<vmem>>, vector<8x1xf32>,
    return
  }
  func.func @transform_0(%arg0: i32) -> (i32, i32) {
    %c0_i32 = arith.constant 0 : i32
    %c0_i32_0 = arith.constant 0 : i32
    %c0_i32_1 = arith.constant 0 : i32
    return %c0_i32, %c0_i32_0 : i32, i32
  }
  func.func @transform_1(%arg0: i32) -> (i32, i32) {
    %c0_i32 = arith.constant 0 : i32
    %c0_i32_0 = arith.constant 0 : i32
    return %arg0, %c0_i32 : i32, i32
  }
  func.func @transform_2(%arg0: i32) -> (i32, i32) {
    %c0_i32 = arith.constant 0 : i32
    %c0_i32_0 = arith.constant 0 : i32
    return %arg0, %c0_i32 : i32, i32
  }
}

</mosaic_0001>

<llo_original>
// kernel: tpu_custom_call.1
$region0: #{tpu_custom_call.1}
  #allocation0 [shape = 'u32[]', space=smem, size = 0x4, offset = 0x4, fixed_abs, tag = 'smem constant byte address 0x4 - core index']
  #allocation1 [shape = 'u32[144,128]{1,0:T(1,128)}', space=vmem, size = 0x12000, scoped, tag = 'internal scratch']
  %s0 = inlined_call_operand.hbm [shape: f32[32,32], index: 0, kind: input, shape index: {}]
  %s1 = inlined_call_operand.hbm [shape: f32[32,32], index: 1, kind: input, shape index: {}]
  %s2 = inlined_call_operand.vmem [shape: f32[32,1], index: 2, kind: output, shape index: {}]
  %s3 = sld [smem:[#allocation0]]
  $region49: #{tpu_custom_call.1} parent=0
    _
  %s5 = ssub.s32 1, %s3
  %s6 = scalar_select 0, %s5, %s3
  $region1: #{tpu_custom_call.1} parent=0
    #allocation2 [shape = 'u8[16384]{0}', space=vmem, size = 0x4000, scoped, tag = 'input window, operand 0, single buffered']
    #allocation3 [shape = 's32[2]{0}', space=sflag, size = 0x8, scoped, tag = 'scoped memory for tpu_custom_call.1']
    #allocation4 [shape = 'u8[8192]{0}', space=vmem, size = 0x2000, scoped, tag = 'input window, operand 1']
    #allocation5 [shape = 's32[2]{0}', space=sflag, size = 0x8, scoped, tag = 'scoped memory for tpu_custom_call.1']
    %7 = vsyncpa [#allocation3], 0
    %8 = vsyncpa [#allocation5], 0
    %s9 = scalar_lea.sflag [#allocation5], 1
    %10 = vsyncpa %s9, 0
    loop: start=0, step=1, limit=6
    $region2: #{tpu_custom_call.1} parent=1 // loop_pre_header
      _
    $region3: #{tpu_custom_call.1} parent=1 // loop_header
      %s12 = sphi 0, %s16
      %p13 = scmp.ge.s32.totalorder %s12, 6
      %s20 = sphi 0, %s20
      %s22 = sphi 0, %s20
      %s23 = sphi 0, %s22
      %s37 = sphi 0, %s23
      %s43 = sphi 0, %s45
      %s46 = sphi 0, %s43
      %s47 = sphi 0, %s46
      %s63 = sphi 0, %s47
      %s69 = sphi 0, %s71
      %s72 = sphi 0, %s69
      %s73 = sphi 0, %s72
      %s89 = sphi 0, %s73
    $region4: #{tpu_custom_call.1} parent=1 // loop_header_branch
      %15 = sbr.rel (%p13) target = $region8
    $region5: #{tpu_custom_call.1} parent=1 // loop_body
      %s17 = ssub.s32 %s12, 1
      %s18 = ssub.s32 %s12, 2
      %s19 = sadd.s32 %s12, 1
      %s21 = sadd.s32 %s20, 1
      %p24 = scmp.eq.s32.totalorder %s12, 3
      %p25 = scmp.ne.s32.totalorder %s20, %s22
      %p26 = scmp.eq.s32.totalorder %s12, 0
      %p27 = por %p25, %p26
      %p28 = scmp.ne.s32.totalorder %s20, %s22
      %p29 = scmp.eq.s32.totalorder %s17, 3
      %p30 = por %p28, %p29
      %p31 = scmp.ne.s32.totalorder %s22, %s23
      %p32 = scmp.eq.s32.totalorder %s17, 0
      %p33 = por %p31, %p32
      %p34 = scmp.ne.s32.totalorder %s22, %s23
      %p35 = scmp.eq.s32.totalorder %s18, 3
      %p36 = por %p34, %p35
      %p38 = scmp.ne.s32.totalorder %s23, %s37
      %p39 = scmp.eq.s32.totalorder %s18, 0
      %p40 = por %p38, %p39
      %s41 = ssub.s32 %s12, %s19
      %p42 = scmp.eq.s32.totalorder %s41, 0
      %s44 = sadd.s32 %s43, 1
      %s45 = scalar_select %p42, %s43, %s44
      %p48 = pneg %p42
      %p49 = scmp.eq.s32.totalorder %s12, 3
      %p50 = por %p48, %p49
      %p51 = scmp.ne.s32.totalorder %s43, %s46
      %p52 = scmp.eq.s32.totalorder %s12, 0
      %p53 = por %p51, %p52
      %p54 = scmp.ne.s32.totalorder %s43, %s46
      %p55 = scmp.eq.s32.totalorder %s17, 3
      %p56 = por %p54, %p55
      %p57 = scmp.ne.s32.totalorder %s46, %s47
      %p58 = scmp.eq.s32.totalorder %s17, 0
      %p59 = por %p57, %p58
      %p60 = scmp.ne.s32.totalorder %s46, %s47
      %p61 = scmp.eq.s32.totalorder %s18, 3
      %p62 = por %p60, %p61
      %p64 = scmp.ne.s32.totalorder %s47, %s63
      %p65 = scmp.eq.s32.totalorder %s18, 0
      %p66 = por %p64, %p65
      %s67 = ssub.s32 %s12, %s19
      %p68 = scmp.eq.s32.totalorder %s67, 0
      %s70 = sadd.s32 %s69, 1
      %s71 = scalar_select %p68, %s69, %s70
      %p74 = pneg %p68
      %p75 = scmp.eq.s32.totalorder %s12, 3
      %p76 = por %p74, %p75
      %p77 = scmp.ne.s32.totalorder %s69, %s72
      %p78 = scmp.eq.s32.totalorder %s12, 0
      %p79 = por %p77, %p78
      %p80 = scmp.ne.s32.totalorder %s69, %s72
      %p81 = scmp.eq.s32.totalorder %s17, 3
      %p82 = por %p80, %p81
      %p83 = scmp.ne.s32.totalorder %s72, %s73
      %p84 = scmp.eq.s32.totalorder %s17, 0
      %p85 = por %p83, %p84
      %p86 = scmp.ne.s32.totalorder %s72, %s73
      %p87 = scmp.eq.s32.totalorder %s18, 3
      %p88 = por %p86, %p87
      %p90 = scmp.ne.s32.totalorder %s73, %s89
      %p91 = scmp.eq.s32.totalorder %s18, 0
      %p92 = por %p90, %p91
      %p93 = scmp.le.s32.totalorder 1, %s12
      %p94 = scmp.lt.s32.totalorder %s12, 5
      %p95 = pnand %p93, %p94
      %p96 = pneg %p95
      // Predicated region
      $region9: #{tpu_custom_call.1} parent=5 // pred_check
        _
      $region10: #{tpu_custom_call.1} parent=5 // pred_check_branch
        %98 = sbr.rel (%p95) target = $region12
      $region11: #{tpu_custom_call.1} parent=5 // pred_region
        %s99 = ssub.s32 %s12, 1
        // Predicated region
        $region13: #{tpu_custom_call.1} parent=11 // pred_check
          %p100 = pneg %p33
        $region14: #{tpu_custom_call.1} parent=11 // pred_check_branch
          %102 = sbr.rel (%p100) target = $region16
        $region15: #{tpu_custom_call.1} parent=11 // pred_region
          %s104 = ssub.s32 512, 512
          %105 = vsyncadd [#allocation3], %s104
          %s106 = sshll.u32 [#allocation2], 4
          %s107 = int_to_ptr.vmem [resolvable:$true] %s106
          %112 = dma.hbm_to_vmem [thread:$0]  %s0, 512, %s107, [#allocation3], 128, 128, 8
        $region16: #{tpu_custom_call.1} parent=11 // pred_fallthru
          _
      $region12: #{tpu_custom_call.1} parent=5 // pred_fallthru
        _
      %p113 = scmp.lt.s32.totalorder %s12, 4
      // Predicated region
      $region17: #{tpu_custom_call.1} parent=5 // pred_check
        %p114 = pneg %p113
      $region18: #{tpu_custom_call.1} parent=5 // pred_check_branch
        %116 = sbr.rel (%p114) target = $region20
      $region19: #{tpu_custom_call.1} parent=5 // pred_region
        // Predicated region
        $region21: #{tpu_custom_call.1} parent=19 // pred_check
          %p117 = pneg %p53
        $region22: #{tpu_custom_call.1} parent=19 // pred_check_branch
          %119 = sbr.rel (%p117) target = $region24
        $region23: #{tpu_custom_call.1} parent=19 // pred_region
          %s120 = sand.u32 %s43, 1
          %s121 = scalar_lea.sflag [#allocation5], %s120
          %s122 = sand.u32 %s43, 1
          %s123 = smul.addr %s122, 8
          %s124 = scalar_lea.vmem [#allocation4], %s123
          %s126 = ssub.s32 128, 128
          %127 = vsyncadd %s121, %s126
          %s128 = smul.addr %s12, 128
          %s129 = scalar_lea.hbm %s1, %s128
          %s131 = sshll.u32 %s124, 4
          %s132 = int_to_ptr.vmem [resolvable:$true] %s131
          %134 = dma.hbm_to_vmem [thread:$0]  %s129, 128, %s132, %s121
        $region24: #{tpu_custom_call.1} parent=19 // pred_fallthru
          _
      $region20: #{tpu_custom_call.1} parent=5 // pred_fallthru
        _
      %p135 = scmp.le.s32.totalorder 1, %s12
      %p136 = scmp.lt.s32.totalorder %s12, 5
      %p137 = pnand %p135, %p136
      %p138 = pneg %p137
      // Predicated region
      $region25: #{tpu_custom_call.1} parent=5 // pred_check
        _
      $region26: #{tpu_custom_call.1} parent=5 // pred_check_branch
        %140 = sbr.rel (%p137) target = $region28
      $region27: #{tpu_custom_call.1} parent=5 // pred_region
        %s141 = ssub.s32 %s12, 1
        // Predicated region
        $region29: #{tpu_custom_call.1} parent=27 // pred_check
          %p142 = pneg %p33
        $region30: #{tpu_custom_call.1} parent=27 // pred_check_branch
          %144 = sbr.rel (%p142) target = $region32
        $region31: #{tpu_custom_call.1} parent=27 // pred_region
          %145 = dma.done [#allocation3], 512
        $region32: #{tpu_custom_call.1} parent=27 // pred_fallthru
          _
        %s146 = sand.u32 %s46, 1
        %s147 = scalar_lea.sflag [#allocation5], %s146
        %s148 = sand.u32 %s46, 1
        %s149 = smul.addr %s148, 8
        %s150 = scalar_lea.vmem [#allocation4], %s149
        // Predicated region
        $region33: #{tpu_custom_call.1} parent=27 // pred_check
          %p151 = pneg %p59
        $region34: #{tpu_custom_call.1} parent=27 // pred_check_branch
          %153 = sbr.rel (%p151) target = $region36
        $region35: #{tpu_custom_call.1} parent=27 // pred_region
          %154 = dma.done %s147, 128
        $region36: #{tpu_custom_call.1} parent=27 // pred_fallthru
          _
        %p155 = pneg %p33
        %p156 = pneg %p30
        %s157 = sand.u32 %s46, 1
        %s158 = scalar_lea.sflag [#allocation5], %s157
        %s159 = sand.u32 %s46, 1
        %s160 = smul.addr %s159, 8
        %s161 = scalar_lea.vmem [#allocation4], %s160
        %p162 = pneg %p59
        %p163 = pneg %p56
        %p164 = pneg %p85
        %p165 = pneg %p82
        %p166 = scmp.lt.s32.totalorder %s17, 3
        %s167 = scalar_select %p166, %s17, 3
        %s168 = smul.addr %s167, 8
        %s169 = scalar_lea.vmem %s2, %s168
        %p170 = scmp.lt.s32.totalorder %s17, 3
        %s171 = scalar_select %p170, %s17, 3
        %s172 = smul.addr %s171, 8
        %s173 = scalar_lea.vmem %s2, %s172
        %v174 = vld [vmem:[#allocation2] sm:$0xff]
        %v175 = vld [vmem:[#allocation2 + $0x8] sm:$0xff]
        %v176 = vld [vmem:[#allocation2 + $0x10] sm:$0xff]
        %v177 = vld [vmem:[#allocation2 + $0x18] sm:$0xff]
        %v178 = vmul.f32 %v174, %v174
        %v179 = vmul.f32 %v175, %v175
        %v180 = vmul.f32 %v176, %v176
        %v181 = vmul.f32 %v177, %v177
        %vm182 = vcmask 261120
        %v183 = vsel %vm182, %v178, 0.0
        %184 = vadd.xlane.f32.xlu0 %v183
        %v185 = vpop.xlane.xlu0 %184
        %v186 = vsel %vm182, %v179, 0.0
        %187 = vadd.xlane.f32.xlu0 %v186
        %v188 = vpop.xlane.xlu0 %187
        %v189 = vsel %vm182, %v180, 0.0
        %190 = vadd.xlane.f32.xlu0 %v189
        %v191 = vpop.xlane.xlu0 %190
        %v192 = vsel %vm182, %v181, 0.0
        %193 = vadd.xlane.f32.xlu0 %v192
        %v194 = vpop.xlane.xlu0 %193
        %v195 = vmax.f32 %v185, 1e-24
        %v196 = vmax.f32 %v188, 1e-24
        %v197 = vmax.f32 %v191, 1e-24
        %v198 = vmax.f32 %v194, 1e-24
        %v199 = vrsqrt.pop %v195
        %v200 = vrsqrt.pop %v196
        %v201 = vrsqrt.pop %v197
        %v202 = vrsqrt.pop %v198
        %v203 = vmul.f32 %v174, %v199
        %v204 = vmul.f32 %v175, %v200
        %v205 = vmul.f32 %v176, %v201
        %v206 = vmul.f32 %v177, %v202
        %v207 = vld [vmem:[%s150] sm:$0xff]
        %v208 = vmul.f32 %v207, %v207
        %v209 = vsel %vm182, %v208, 0.0
        %210 = vadd.xlane.f32.xlu0 %v209
        %v211 = vpop.xlane.xlu0 %210
        %v212 = vmax.f32 %v211, 1e-24
        %v213 = vrsqrt.pop %v212
        %v214 = vmul.f32 %v207, %v213
        %v216 = vsel %vm182, %v214, 0
        %v219 = vsel %vm182, %v203, 0
        %v222 = vsel %vm182, %v204, 0
        %v225 = vsel %vm182, %v205, 0
        %v228 = vsel %vm182, %v206, 0
        %230 = vmatprep.subr.mxu0 0.0
        %231 = vmatpush1.xpose.msra.mxu0 %v219
        %232 = vmatprep.subr.mxu0 0.0
        %233 = vmatpush1.xpose.msra.mxu0 %v222
        %234 = vmatprep.subr.mxu0 0.0
        %235 = vmatpush1.xpose.msra.mxu0 %v225
        %236 = vmatprep.subr.mxu0 0.0
        %237 = vmatpush1.xpose.msra.mxu0 %v228
        %238 = vmatprep.subr.mxu0 0.0
        %239 = vmatpush1.xpose.msra.mxu0 0.0
        %240 = vmatprep.subr.mxu0 0.0
        %241 = vmatpush1.xpose.msra.mxu0 0.0
        %242 = vmatprep.subr.mxu0 0.0
        %243 = vmatpush1.xpose.msra.mxu0 0.0
        %244 = vmatprep.subr.mxu0 0.0
        %245 = vmatpush1.xpose.msra.mxu0 0.0
        %246 = vmatprep.subr.mxu0 0.0
        %247 = vmatpush1.xpose.msra.mxu0 0.0
        %248 = vmatprep.subr.mxu0 0.0
        %249 = vmatpush1.xpose.msra.mxu0 0.0
        %250 = vmatprep.subr.mxu0 0.0
        %251 = vmatpush1.xpose.msra.mxu0 0.0
        %252 = vmatprep.subr.mxu0 0.0
        %253 = vmatpush1.xpose.msra.mxu0 0.0
        %254 = vmatprep.subr.mxu0 0.0
        %255 = vmatpush1.xpose.msra.mxu0 0.0
        %256 = vmatprep.subr.mxu0 0.0
        %257 = vmatpush1.xpose.msra.mxu0 0.0
        %258 = vmatprep.subr.mxu0 0.0
        %259 = vmatpush1.xpose.msra.mxu0 0.0
        %260 = vmatprep.subr.mxu0 0.0
        %261 = vmatpush1.xpose.msra.mxu0 0.0
        %262 = vmatprep.subr.mxu0 0.0
        %263 = vmatpush1.xpose.msra.mxu0 0.0
        %264 = vmatprep.subr.mxu0 0.0
        %265 = vmatpush1.xpose.msra.mxu0 0.0
        %266 = vmatprep.subr.mxu0 0.0
        %267 = vmatpush1.xpose.msra.mxu0 0.0
        %268 = vmatprep.subr.mxu0 0.0
        %269 = vmatpush1.xpose.msra.mxu0 0.0
        %270 = vmatprep.subr.mxu0 0.0
        %271 = vmatpush1.xpose.msra.mxu0 0.0
        %272 = vmatprep.subr.mxu0 0.0
        %273 = vmatpush1.xpose.msra.mxu0 0.0
        %274 = vmatprep.subr.mxu0 0.0
        %275 = vmatpush1.xpose.msra.mxu0 0.0
        %276 = vmatprep.subr.mxu0 0.0
        %277 = vmatpush1.xpose.msra.mxu0 0.0
        %278 = vmatprep.subr.mxu0 0.0
        %279 = vmatpush1.xpose.msra.mxu0 0.0
        %280 = vmatprep.subr.mxu0 0.0
        %281 = vmatpush1.xpose.msra.mxu0 0.0
        %282 = vmatprep.subr.mxu0 0.0
        %283 = vmatpush1.xpose.msra.mxu0 0.0
        %284 = vmatprep.subr.mxu0 0.0
        %285 = vmatpush1.xpose.msra.mxu0 0.0
        %286 = vmatprep.subr.mxu0 0.0
        %287 = vmatpush1.xpose.msra.mxu0 0.0
        %288 = vmatprep.subr.mxu0 0.0
        %289 = vmatpush1.xpose.msra.mxu0 0.0
        %290 = vmatprep.subr.mxu0 0.0
        %291 = vmatpush1.xpose.msra.mxu0 0.0
        %292 = vmatprep.subr.mxu0 0.0
        %293 = vmatpush1.xpose.msra.mxu0 0.0
        %294 = vmatprep.mubr.f32.mxu0 0.0
        %295 = vmatmul.mubr.f32.gmra.mrb[0].mxu0 %v216
        %v296 = vpop.f32.mrb[0].mxu0
        %v297 = vadd.f32 0.0, %v296
        %v298 = vpop.f32.mrb[0].mxu0
        %299 = vdwg.mxu0
        %s300 = smul.u32 %s17, 8
        %v301 = vlaneseq
        %v302 = vshrl.u32 %v301, 7
        %v303 = vstv %s300
        %v304 = vadd.s32 %v303, %v302
        %v305 = vlaneseq
        %v306 = vand.u32 %v305, 127
        %vm307 = vcmp.lt.s32.totalorder %v306, 32
        %vm308 = vcmp.ne.s32.totalorder %v306, %v304
        %v309 = vmul.f32 %v297, 2.0
        %v310 = vmul.f32 %v309, 1.442695
        %v311 = vpow.pop %v310
        %vm312 = vmand %vm307, %vm308
        %v313 = vsel %vm312, %v311, 0.0
        %v314 = vsel %vm182, %v313, 0.0
        %315 = vadd.xlane.f32.xlu0 %v314
        %v316 = vpop.xlane.xlu0 %315
        %vm317 = vcmp.lt.s32.totalorder %v304, 16
        %v318 = vadd.s32 %v304, 16
        %v319 = vsub.s32 %v304, 16
        %v320 = vsel %vm317, %v318, %v319
        %vm321 = vcmp.eq.s32.totalorder %v306, %v320
        %v322 = vsel %vm321, %v297, 0.0
        %v323 = vsel %vm182, %v322, 0.0
        %324 = vadd.xlane.f32.xlu0 %v323
        %v325 = vpop.xlane.xlu0 %324
        %vm326 = vcmp.lt.s32.totalorder %v304, 32
        %v327 = vlog2.pop %v316
        %v328 = vmul.f32 %v327, 0.6931472
        %v329 = vmul.f32 %v325, 2.0
        %v330 = vsub.f32 %v328, %v329
        %v331 = vsel %vm326, %v330, 0.0
        %vm332 = vcmask 7168
        %333 = vst.msk [vmem:[%s173] sm:$0xff] %vm332, %v331
        %p334 = scmp.lt.s32.totalorder %s17, 3
        %s335 = scalar_select %p334, %s17, 3
        %s336 = smul.addr %s335, 8
        %s337 = scalar_lea.vmem %s2, %s336
        // Predicated region
        $region37: #{tpu_custom_call.1} parent=27 // pred_check
          %p338 = pneg %p82
        $region38: #{tpu_custom_call.1} parent=27 // pred_check_branch
          %340 = sbr.rel (%p338) target = $region40
        $region39: #{tpu_custom_call.1} parent=27 // pred_region
          _
        $region40: #{tpu_custom_call.1} parent=27 // pred_fallthru
          _
      $region28: #{tpu_custom_call.1} parent=5 // pred_fallthru
        _
      %p341 = scmp.le.s32.totalorder 2, %s12
      // Predicated region
      $region41: #{tpu_custom_call.1} parent=5 // pred_check
        %p342 = pneg %p341
      $region42: #{tpu_custom_call.1} parent=5 // pred_check_branch
        %344 = sbr.rel (%p342) target = $region44
      $region43: #{tpu_custom_call.1} parent=5 // pred_region
        %s345 = ssub.s32 %s12, 2
        // Predicated region
        $region45: #{tpu_custom_call.1} parent=43 // pred_check
          %p346 = pneg %p88
        $region46: #{tpu_custom_call.1} parent=43 // pred_check_branch
          %348 = sbr.rel (%p346) target = $region48
        $region47: #{tpu_custom_call.1} parent=43 // pred_region
          %p349 = scmp.lt.s32.totalorder %s18, 3
          %s350 = scalar_select %p349, %s18, 3
          %s351 = smul.addr %s350, 8
          %s352 = scalar_lea.vmem %s2, %s351
        $region48: #{tpu_custom_call.1} parent=43 // pred_fallthru
          _
      $region44: #{tpu_custom_call.1} parent=5 // pred_fallthru
        _
    $region6: #{tpu_custom_call.1} parent=1 // loop_footer
      %s16 = sadd.s32 1, %s12
    $region7: #{tpu_custom_call.1} parent=1 // loop_footer_branch
      %11 = sbr.rel target = $region3
    $region8: #{tpu_custom_call.1} parent=1 // loop_exit
      _
    %353 = vsyncpa [#allocation3], 1
    %s354 = scalar_lea.sflag [#allocation3], 1
    %355 = vsyncpa %s354, 1
    %356 = vsyncpa [#allocation5], 1
    %s357 = scalar_lea.sflag [#allocation5], 1
    %358 = vsyncpa %s357, 1

</llo_original>
